<compile_context>
chip_gen: v7x
topology: tpu7x:2x2x1
jax: 0.10.0
libtpu: 0.0.40
codegen_flags: <defaults>
</compile_context>

<pallas_src>
import functools

import jax
import jax.numpy as jnp
from jax.experimental import pallas as pl
from jax.experimental.pallas import tpu as pltpu


def _round_up(v, m):
    return (v + m - 1) // m * m


# --------------------------------------------------------------------------
# Feature matmul: XW = X @ W (computed once per layer, outside the N x N grid)
# --------------------------------------------------------------------------
def feature_matmul_kernel(x_ref, w_ref, o_ref):
    o_ref[...] = jnp.dot(
        x_ref[...], w_ref[...], preferred_element_type=jnp.float32
    ).astype(o_ref.dtype)


def feature_matmul_pallas(x, w, out_dtype, block_rows):
    n_pad, f_in = x.shape
    f_out = w.shape[1]
    tm = min(block_rows, n_pad)
    assert n_pad % tm == 0
    return pl.pallas_call(
        feature_matmul_kernel,
        out_shape=jax.ShapeDtypeStruct((n_pad, f_out), out_dtype),
        grid_spec=pltpu.PrefetchScalarGridSpec(
            num_scalar_prefetch=0,
            grid=(n_pad // tm,),
            in_specs=[
                pl.BlockSpec((tm, f_in), lambda i: (i, 0)),
                pl.BlockSpec((f_in, f_out), lambda i: (0, 0)),
            ],
            out_specs=pl.BlockSpec((tm, f_out), lambda i: (i, 0)),
        ),
        compiler_params=pltpu.CompilerParams(dimension_semantics=("parallel",)),
    )(x, w)


# --------------------------------------------------------------------------
# Aggregation: out[i] = sum_k A[i, k] @ XW[k]  (+ bias, optional ReLU)
# --------------------------------------------------------------------------
def gcn_agg_kernel(ids_ref, cnt_ref, a_ref, xw_ref, b_ref, o_ref, *scratch,
                   apply_relu, tk, xw_resident):
    i = pl.program_id(0)
    k = pl.program_id(1)
    # f32-output layer accumulates directly into the VMEM-resident o_ref block;
    # bf16-output layer uses the f32 scratch accumulator.
    acc_ref = scratch[0] if scratch else o_ref

    @pl.when(k == 0)
    def _init():
        acc_ref[...] = jnp.zeros_like(acc_ref)

    # Block-sparse gate: only accumulate for grid steps that map to a nonzero
    # A tile of this row tile (padding steps repeat the previous block index,
    # so their DMA is skipped and this body never runs).
    @pl.when(k < cnt_ref[i])
    def _accumulate():
        if xw_resident:
            row0 = pl.multiple_of(ids_ref[i, k] * tk, tk)
            xw_tile = xw_ref[pl.ds(row0, tk), :]
        else:
            xw_tile = xw_ref[...]
        acc_ref[...] += jnp.dot(
            a_ref[...], xw_tile, preferred_element_type=jnp.float32
        )

    @pl.when(k == pl.num_programs(1) - 1)
    def _finalize():
        out = acc_ref[...] + b_ref[...]
        if apply_relu:
            out = jnp.maximum(out, 0.0)
        o_ref[...] = out.astype(o_ref.dtype)


def _a_block_spec(tm, tk, index_map):
    # Review request: deeper A-operand pipeline.  Fall back to the default
    # depth-2 double-buffering if this jax version lacks pipeline_mode/Buffered.
    try:
        return pl.BlockSpec((tm, tk), index_map, pipeline_mode=pl.Buffered(3))
    except (AttributeError, TypeError):
        return pl.BlockSpec((tm, tk), index_map)


def gcn_agg_pallas(a_hat, xw, bias, ids, counts, *, apply_relu, tm, tk, out_dtype):
    n_pad = a_hat.shape[0]
    f_out = xw.shape[1]
    assert n_pad % tm == 0 and n_pad % tk == 0
    grid = (n_pad // tm, n_pad // tk)

    xw_itemsize = xw.dtype.itemsize
    out_itemsize = jnp.dtype(out_dtype).itemsize

    # Keep XW fully VMEM-resident when small: DMA'd once, sliced in-kernel.
    xw_resident = n_pad * f_out * xw_itemsize <= 8 * 1024 * 1024
    if xw_resident:
        xw_spec = pl.BlockSpec((n_pad, f_out), lambda i, k, ids, cnt: (0, 0))
    else:
        xw_spec = pl.BlockSpec((tk, f_out), lambda i, k, ids, cnt: (ids[i, k], 0))

    # f32 scratch accumulator only when the output dtype is narrower than f32.
    use_scratch = out_itemsize < 4
    scratch_shapes = [pltpu.VMEM((tm, f_out), jnp.float32)] if use_scratch else []

    # Explicit VMEM budget (A triple-buffered + XW (x2) + out (x2) + acc + bias),
    # capped at 48 MiB to leave compiler-scratch headroom under v7x's 64 MiB/TC.
    need = (3 * tm * tk * a_hat.dtype.itemsize
            + 2 * (n_pad if xw_resident else tk) * f_out * xw_itemsize
            + 2 * tm * f_out * out_itemsize
            + (tm * f_out * 4 if use_scratch else 0)
            + 2 * 8 * f_out * 4)
    vmem_limit = int(max(32 * 1024 * 1024, min(2 * need, 48 * 1024 * 1024)))

    cost = pl.CostEstimate(  # dense upper bound; advisory only
        flops=2 * n_pad * n_pad * f_out,
        transcendentals=0,
        bytes_accessed=(n_pad * n_pad * a_hat.dtype.itemsize
                        + n_pad * f_out * xw_itemsize
                        + n_pad * f_out * out_itemsize),
    )

    kernel = functools.partial(
        gcn_agg_kernel, apply_relu=apply_relu, tk=tk, xw_resident=xw_resident
    )

    return pl.pallas_call(
        kernel,
        out_shape=jax.ShapeDtypeStruct((n_pad, f_out), out_dtype),
        grid_spec=pltpu.PrefetchScalarGridSpec(
            num_scalar_prefetch=2,  # ids[n_i, n_k], counts[n_i] live in SMEM
            grid=grid,
            in_specs=[
                # A tile, column-remapped to visit only nonzero tiles.
                _a_block_spec(tm, tk, lambda i, k, ids, cnt: (i, ids[i, k])),
                xw_spec,
                pl.BlockSpec((1, f_out), lambda i, k, ids, cnt: (0, 0)),  # bias
            ],
            out_specs=pl.BlockSpec((tm, f_out), lambda i, k, ids, cnt: (i, 0)),
            scratch_shapes=scratch_shapes,
        ),
        compiler_params=pltpu.CompilerParams(
            dimension_semantics=("parallel", "arbitrary"),
            vmem_limit_bytes=vmem_limit,
        ),
        cost_estimate=cost,
    )(ids, counts, a_hat, xw, bias)


# --------------------------------------------------------------------------
# Wrapper: tile selection, padding, block-sparsity metadata, 2-layer encoder
# --------------------------------------------------------------------------
def _select_tile(n, requested=None):
    n128 = _round_up(n, 128)
    if requested is not None:
        return _round_up(min(requested, n128), 128)
    # Largest tile whose padding waste beyond the unavoidable 128-alignment is
    # < ~3% of N, preferring >= 2 row tiles so both v7x TensorCores get work.
    for blk in (1024, 512, 256, 128):
        n_pad = _round_up(n128, blk)
        if (n_pad - n128) <= max(0.03 * n, 0) and n_pad // blk >= 2:
            return blk
    return 128


def _tile_sparsity(a_p, blk):
    """Per row tile: sorted nonzero contraction-tile ids (padded by repeating the
    last valid id so the repeated block index skips the DMA) and their count."""
    n_pad = a_p.shape[0]
    n_t = n_pad // blk
    mask = (a_p != 0).reshape(n_t, blk, n_t, blk).any(axis=(1, 3))   # [n_t, n_t]
    counts = mask.sum(axis=1).astype(jnp.int32)                      # [n_t]
    k_idx = jnp.arange(n_t, dtype=jnp.int32)
    order = jnp.argsort(
        jnp.where(mask, k_idx[None, :], k_idx[None, :] + n_t), axis=1
    ).astype(jnp.int32)
    last = jnp.take_along_axis(order, jnp.maximum(counts - 1, 0)[:, None], axis=1)
    ids = jnp.where(k_idx[None, :] < counts[:, None], order, last).astype(jnp.int32)
    return ids, counts


def gcn_encoder_pallas(a_hat, x, w1, b1, w2, b2, *, block_n=None,
                       compute_dtype=jnp.bfloat16):
    """2-layer GCN encoder: relu(GCNConv1) -> GCNConv2."""
    n = x.shape[0]
    in_c, hid_c = w1.shape
    out_c = w2.shape[1]

    blk = _select_tile(n, block_n)
    assert blk % 128 == 0
    n_pad = _round_up(n, blk)
    in_p = _round_up(in_c, 128)
    hid_p = _round_up(hid_c, 128)
    out_p = _round_up(out_c, 128)

    def pad2(arr, rows, cols, dtype):
        arr = arr.astype(dtype)
        return jnp.pad(arr, ((0, rows - arr.shape[0]), (0, cols - arr.shape[1])))

    a_p = pad2(a_hat, n_pad, n_pad, compute_dtype)
    x_p = pad2(x, n_pad, in_p, jnp.float32)       # layer-1 XW computed in f32
    w1_p = pad2(w1, in_p, hid_p, jnp.float32)
    w2_p = pad2(w2, hid_p, out_p, compute_dtype)
    b1_p = pad2(b1.reshape(1, -1), 1, hid_p, jnp.float32)
    b2_p = pad2(b2.reshape(1, -1), 1, out_p, jnp.float32)

    # Block-sparsity metadata for A_hat, shared by both layers.
    ids, counts = _tile_sparsity(a_p, blk)

    # Layer 1: H = relu(A_hat @ (X @ W1) + b1), kept bf16 for the next pass.
    xw1 = feature_matmul_pallas(x_p, w1_p, compute_dtype, blk)
    h = gcn_agg_pallas(a_p, xw1, b1_p, ids, counts,
                       apply_relu=True, tm=blk, tk=blk, out_dtype=compute_dtype)
    # Layer 2: Y = A_hat @ (H @ W2) + b2 (no activation, like the PyTorch module).
    xw2 = feature_matmul_pallas(h, w2_p, compute_dtype, blk)
    out = gcn_agg_pallas(a_p, xw2, b2_p, ids, counts,
                         apply_relu=False, tm=blk, tk=blk, out_dtype=jnp.float32)
    return out[:n, :out_c]


def build_normalized_adjacency(edge_index, num_nodes):
    """Dense D^-1/2 (A + I) D^-1/2 following PyG gcn_norm (add_self_loops=True).
    Plain-JAX glue (sparse scatter-add has no clean tile-rectangular Pallas form)."""
    src = edge_index[0]
    dst = edge_index[1]
    loop = jnp.arange(num_nodes, dtype=edge_index.dtype)
    src = jnp.concatenate([src, loop])
    dst = jnp.concatenate([dst, loop])
    ones = jnp.ones(src.shape[0], dtype=jnp.float32)
    deg = jnp.zeros((num_nodes,), dtype=jnp.float32).at[dst].add(ones)
    deg_inv_sqrt = jnp.where(deg > 0, jax.lax.rsqrt(deg), 0.0)
    norm = deg_inv_sqrt[src] * deg_inv_sqrt[dst]
    # message flows src -> dst:  out[dst] += norm * x[src]
    a_hat = jnp.zeros((num_nodes, num_nodes), dtype=jnp.float32).at[dst, src].add(norm)
    return a_hat


def glorot(key, shape):
    fan_in, fan_out = shape
    limit = jnp.sqrt(6.0 / (fan_in + fan_out))
    return jax.random.uniform(key, shape, jnp.float32, -limit, limit)


def reference_gcn(a_hat, x, w1, b1, w2, b2):
    h = jnp.maximum(a_hat @ (x @ w1) + b1, 0.0)
    return a_hat @ (h @ w2) + b2


if __name__ == "__main__":
    # Small deterministic problem: 200 nodes, 600 random edges,
    # in_channels=16, hidden_channels=32, out_channels=16.
    num_nodes = 200
    num_edges = 600
    in_channels = 16
    hidden_channels = 32
    out_channels = 16

    key = jax.random.PRNGKey(0)
    k_x, k_e1, k_e2, k_w1, k_w2, k_b1, k_b2 = jax.random.split(key, 7)

    x = jax.random.normal(k_x, (num_nodes, in_channels), dtype=jnp.float32)
    edge_index = jnp.stack(
        [
            jax.random.randint(k_e1, (num_edges,), 0, num_nodes, dtype=jnp.int32),
            jax.random.randint(k_e2, (num_edges,), 0, num_nodes, dtype=jnp.int32),
        ],
        axis=0,
    )

    # GCNConv parameters (glorot weights; non-zero biases to exercise the bias path).
    w1 = glorot(k_w1, (in_channels, hidden_channels))
    w2 = glorot(k_w2, (hidden_channels, out_channels))
    b1 = 0.1 * jax.random.normal(k_b1, (hidden_channels,), dtype=jnp.float32)
    b2 = 0.1 * jax.random.normal(k_b2, (out_channels,), dtype=jnp.float32)

    a_hat = build_normalized_adjacency(edge_index, num_nodes)

    # Auto tile selection: N=200 pads to 256 with blk=128 -> a 2x2 (row,
    # contraction) grid (both v7x TCs get work); large graphs pick 512/1024.
    out = gcn_encoder_pallas(a_hat, x, w1, b1, w2, b2)
    out = jax.block_until_ready(out)

    ref = reference_gcn(a_hat, x, w1, b1, w2, b2)
    assert out.shape == (num_nodes, out_channels)
    # bf16 A_hat / XW / inter-layer activations -> looser tolerance than pure f32.
    max_err = float(jnp.max(jnp.abs(out - ref)))
    assert jnp.allclose(out, ref, atol=5e-2, rtol=5e-2), max_err

    print("KERNEL_OK")
</pallas_src>

<mosaic_0001>
module attributes {stable_mosaic.version = 11 : i64} {
  func.func @feature_matmul_kernel(%arg0: i32, %arg1: memref<128x128xf32, #tpu.memory_space<vmem>>, %arg2: memref<128x128xf32, #tpu.memory_space<vmem>>, %arg3: memref<128x128xbf16, #tpu.memory_space<vmem>>) attributes {dimension_semantics = [#tpu.dimension_semantics<parallel>], iteration_bounds = array<i64: 2>, scalar_prefetch = 0 : i64, scratch_operands = 0 : i64, tpu.core_type = #tpu.core_type<tc>, window_params = [{transform_indices = @transform_0, window_bounds = array<i64: 128, 128>}, {pipeline_mode = #tpu.pipeline_mode<synchronous>, transform_indices = @transform_1, window_bounds = array<i64: 128, 128>}, {transform_indices = @transform_2, window_bounds = array<i64: 128, 128>}]} {
    %c0 = arith.constant 0 : index
    %c0_0 = arith.constant 0 : index
    %0 = vector.load %arg1[%c0, %c0_0] : memref<128x128xf32, #tpu.memory_space<vmem>>, vector<128x128xf32>
    %c0_1 = arith.constant 0 : index
    %c0_2 = arith.constant 0 : index
    %1 = vector.load %arg2[%c0_1, %c0_2] : memref<128x128xf32, #tpu.memory_space<vmem>>, vector<128x128xf32>
    %cst = arith.constant dense<0.000000e+00> : vector<128x128xf32>
    %2 = tpu.matmul %0, %1, %cst {dimension_numbers = #tpu.dot_dimension_numbers<[1], [0], [0], [1], [0, 0, 1, 1], [], []>} : vector<128x128xf32>, vector<128x128xf32>, vector<128x128xf32> -> vector<128x128xf32>
    %3 = arith.truncf %2 : vector<128x128xf32> to vector<128x128xbf16>
    %c0_3 = arith.constant 0 : index
    %c0_4 = arith.constant 0 : index
    %4 = vector.load %arg3[%c0_3, %c0_4] : memref<128x128xbf16, #tpu.memory_space<vmem>>, vector<128x128xbf16>
    tpu.vector_store %arg3[%c0_3, %c0_4], %3 {strides = array<i32>} : memref<128x128xbf16, #tpu.memory_space<vmem>>, vector<128x128xbf16>,
    return
  }
  func.func @transform_0(%arg0: i32) -> (i32, i32) {
    %c0_i32 = arith.constant 0 : i32
    %c0_i32_0 = arith.constant 0 : i32
    return %arg0, %c0_i32 : i32, i32
  }
  func.func @transform_1(%arg0: i32) -> (i32, i32) {
    %c0_i32 = arith.constant 0 : i32
    %c0_i32_0 = arith.constant 0 : i32
    %c0_i32_1 = arith.constant 0 : i32
    return %c0_i32, %c0_i32_0 : i32, i32
  }
  func.func @transform_2(%arg0: i32) -> (i32, i32) {
    %c0_i32 = arith.constant 0 : i32
    %c0_i32_0 = arith.constant 0 : i32
    return %arg0, %c0_i32 : i32, i32
  }
}

</mosaic_0001>

<llo_original>
// kernel: tpu_custom_call.1
$region0: #{tpu_custom_call.1}
  #allocation0 [shape = 'u32[]', space=smem, size = 0x4, offset = 0x4, fixed_abs, tag = 'smem constant byte address 0x4 - core index']
  #allocation1 [shape = 'u32[144,128]{1,0:T(1,128)}', space=vmem, size = 0x12000, scoped, tag = 'internal scratch']
  %s0 = inlined_call_operand.hbm [shape: f32[256,128], index: 0, kind: input, shape index: {}]
  %s1 = inlined_call_operand.hbm [shape: f32[128,128], index: 1, kind: input, shape index: {}]
  %s2 = inlined_call_operand.hbm [shape: bf16[256,128], index: 2, kind: output, shape index: {}]
  %s3 = sld [smem:[#allocation0]]
  $region49: #{tpu_custom_call.1} parent=0
    _
  %s5 = ssub.s32 1, %s3
  %s6 = scalar_select 0, %s5, %s3
  $region1: #{tpu_custom_call.1} parent=0
    #allocation2 [shape = 'u8[131072]{0}', space=vmem, size = 0x20000, scoped, tag = 'input window, operand 0']
    #allocation3 [shape = 's32[2]{0}', space=sflag, size = 0x8, scoped, tag = 'scoped memory for tpu_custom_call.1']
    #allocation4 [shape = 's32[2]{0}', space=sflag, size = 0x8, scoped, tag = 'scoped memory for tpu_custom_call.1']
    #allocation5 [shape = 'u8[65536]{0}', space=vmem, size = 0x10000, scoped, tag = 'input window, operand 1, single buffered']
    #allocation6 [shape = 's32[1]{0}', space=sflag, size = 0x4, scoped, tag = 'scoped memory for tpu_custom_call.1']
    #allocation7 [shape = 'u8[65536]{0}', space=vmem, size = 0x10000, scoped, tag = 'output window, operand 0']
    %7 = vsyncpa [#allocation3], 0
    %s8 = scalar_lea.sflag [#allocation3], 1
    %9 = vsyncpa %s8, 0
    %10 = vsyncpa [#allocation6], 0
    %11 = vsyncpa [#allocation4], 0
    %s12 = scalar_lea.sflag [#allocation4], 1
    %13 = vsyncpa %s12, 0
    loop: start=0, step=1, limit=4
    $region2: #{tpu_custom_call.1} parent=1 // loop_pre_header
      _
    $region3: #{tpu_custom_call.1} parent=1 // loop_header
      %s15 = sphi 0, %s19
      %p16 = scmp.ge.s32.totalorder %s15, 4
      %s25 = sphi 0, %s27
      %s28 = sphi 0, %s25
      %s29 = sphi 0, %s28
      %s45 = sphi 0, %s29
      %s49 = sphi 0, %s49
      %s51 = sphi 0, %s49
      %s52 = sphi 0, %s51
      %s66 = sphi 0, %s52
      %s72 = sphi 0, %s74
      %s75 = sphi 0, %s72
      %s76 = sphi 0, %s75
      %s92 = sphi 0, %s76
    $region4: #{tpu_custom_call.1} parent=1 // loop_header_branch
      %18 = sbr.rel (%p16) target = $region8
    $region5: #{tpu_custom_call.1} parent=1 // loop_body
      %s20 = ssub.s32 %s15, 1
      %s21 = ssub.s32 %s15, 2
      %s22 = sadd.s32 %s15, 1
      %s23 = ssub.s32 %s15, %s22
      %p24 = scmp.eq.s32.totalorder %s23, 0
      %s26 = sadd.s32 %s25, 1
      %s27 = scalar_select %p24, %s25, %s26
      %p30 = pneg %p24
      %p31 = scmp.eq.s32.totalorder %s15, 1
      %p32 = por %p30, %p31
      %p33 = scmp.ne.s32.totalorder %s25, %s28
      %p34 = scmp.eq.s32.totalorder %s15, 0
      %p35 = por %p33, %p34
      %p36 = scmp.ne.s32.totalorder %s25, %s28
      %p37 = scmp.eq.s32.totalorder %s20, 1
      %p38 = por %p36, %p37
      %p39 = scmp.ne.s32.totalorder %s28, %s29
      %p40 = scmp.eq.s32.totalorder %s20, 0
      %p41 = por %p39, %p40
      %p42 = scmp.ne.s32.totalorder %s28, %s29
      %p43 = scmp.eq.s32.totalorder %s21, 1
      %p44 = por %p42, %p43
      %p46 = scmp.ne.s32.totalorder %s29, %s45
      %p47 = scmp.eq.s32.totalorder %s21, 0
      %p48 = por %p46, %p47
      %s50 = sadd.s32 %s49, 1
      %p53 = scmp.eq.s32.totalorder %s15, 1
      %p54 = scmp.ne.s32.totalorder %s49, %s51
      %p55 = scmp.eq.s32.totalorder %s15, 0
      %p56 = por %p54, %p55
      %p57 = scmp.ne.s32.totalorder %s49, %s51
      %p58 = scmp.eq.s32.totalorder %s20, 1
      %p59 = por %p57, %p58
      %p60 = scmp.ne.s32.totalorder %s51, %s52
      %p61 = scmp.eq.s32.totalorder %s20, 0
      %p62 = por %p60, %p61
      %p63 = scmp.ne.s32.totalorder %s51, %s52
      %p64 = scmp.eq.s32.totalorder %s21, 1
      %p65 = por %p63, %p64
      %p67 = scmp.ne.s32.totalorder %s52, %s66
      %p68 = scmp.eq.s32.totalorder %s21, 0
      %p69 = por %p67, %p68
      %s70 = ssub.s32 %s15, %s22
      %p71 = scmp.eq.s32.totalorder %s70, 0
      %s73 = sadd.s32 %s72, 1
      %s74 = scalar_select %p71, %s72, %s73
      %p77 = pneg %p71
      %p78 = scmp.eq.s32.totalorder %s15, 1
      %p79 = por %p77, %p78
      %p80 = scmp.ne.s32.totalorder %s72, %s75
      %p81 = scmp.eq.s32.totalorder %s15, 0
      %p82 = por %p80, %p81
      %p83 = scmp.ne.s32.totalorder %s72, %s75
      %p84 = scmp.eq.s32.totalorder %s20, 1
      %p85 = por %p83, %p84
      %p86 = scmp.ne.s32.totalorder %s75, %s76
      %p87 = scmp.eq.s32.totalorder %s20, 0
      %p88 = por %p86, %p87
      %p89 = scmp.ne.s32.totalorder %s75, %s76
      %p90 = scmp.eq.s32.totalorder %s21, 1
      %p91 = por %p89, %p90
      %p93 = scmp.ne.s32.totalorder %s76, %s92
      %p94 = scmp.eq.s32.totalorder %s21, 0
      %p95 = por %p93, %p94
      %p96 = scmp.le.s32.totalorder 1, %s15
      %p97 = scmp.lt.s32.totalorder %s15, 3
      %p98 = pnand %p96, %p97
      %p99 = pneg %p98
      // Predicated region
      $region9: #{tpu_custom_call.1} parent=5 // pred_check
        _
      $region10: #{tpu_custom_call.1} parent=5 // pred_check_branch
        %101 = sbr.rel (%p98) target = $region12
      $region11: #{tpu_custom_call.1} parent=5 // pred_region
        %s102 = ssub.s32 %s15, 1
        // Predicated region
        $region13: #{tpu_custom_call.1} parent=11 // pred_check
          %p103 = pneg %p62
        $region14: #{tpu_custom_call.1} parent=11 // pred_check_branch
          %105 = sbr.rel (%p103) target = $region16
        $region15: #{tpu_custom_call.1} parent=11 // pred_region
          %s107 = ssub.s32 2048, 2048
          %108 = vsyncadd [#allocation6], %s107
          %s109 = sshll.u32 [#allocation5], 4
          %s110 = int_to_ptr.vmem [resolvable:$true] %s109
          %115 = dma.hbm_to_vmem [thread:$0]  %s1, 2048, %s110, [#allocation6], 128, 128, 8
        $region16: #{tpu_custom_call.1} parent=11 // pred_fallthru
          _
      $region12: #{tpu_custom_call.1} parent=5 // pred_fallthru
        _
      %p116 = scmp.lt.s32.totalorder %s15, 2
      // Predicated region
      $region17: #{tpu_custom_call.1} parent=5 // pred_check
        %p117 = pneg %p116
      $region18: #{tpu_custom_call.1} parent=5 // pred_check_branch
        %119 = sbr.rel (%p117) target = $region20
      $region19: #{tpu_custom_call.1} parent=5 // pred_region
        // Predicated region
        $region21: #{tpu_custom_call.1} parent=19 // pred_check
          %p120 = pneg %p35
        $region22: #{tpu_custom_call.1} parent=19 // pred_check_branch
          %122 = sbr.rel (%p120) target = $region24
        $region23: #{tpu_custom_call.1} parent=19 // pred_region
          %s123 = sand.u32 %s25, 1
          %s124 = scalar_lea.sflag [#allocation3], %s123
          %s125 = sand.u32 %s25, 1
          %s126 = smul.addr %s125, 128
          %s127 = scalar_lea.vmem [#allocation2], %s126
          %s128 = smul.u32 16, %s15
          %s130 = ssub.s32 2048, 2048
          %131 = vsyncadd %s124, %s130
          %s132 = smul.addr %s128, 128
          %s133 = scalar_lea.hbm %s0, %s132
          %s134 = sshll.u32 %s127, 4
          %s135 = int_to_ptr.vmem [resolvable:$true] %s134
          %140 = dma.hbm_to_vmem [thread:$0]  %s133, 2048, %s135, %s124, 128, 128, 8
        $region24: #{tpu_custom_call.1} parent=19 // pred_fallthru
          _
      $region20: #{tpu_custom_call.1} parent=5 // pred_fallthru
        _
      %p141 = scmp.le.s32.totalorder 1, %s15
      %p142 = scmp.lt.s32.totalorder %s15, 3
      %p143 = pnand %p141, %p142
      %p144 = pneg %p143
      // Predicated region
      $region25: #{tpu_custom_call.1} parent=5 // pred_check
        _
      $region26: #{tpu_custom_call.1} parent=5 // pred_check_branch
        %146 = sbr.rel (%p143) target = $region28
      $region27: #{tpu_custom_call.1} parent=5 // pred_region
        %s147 = ssub.s32 %s15, 1
        %s148 = sand.u32 %s28, 1
        %s149 = scalar_lea.sflag [#allocation3], %s148
        %s150 = sand.u32 %s28, 1
        %s151 = smul.addr %s150, 128
        %s152 = scalar_lea.vmem [#allocation2], %s151
        // Predicated region
        $region29: #{tpu_custom_call.1} parent=27 // pred_check
          %p153 = pneg %p41
        $region30: #{tpu_custom_call.1} parent=27 // pred_check_branch
          %155 = sbr.rel (%p153) target = $region32
        $region31: #{tpu_custom_call.1} parent=27 // pred_region
          %156 = dma.done %s149, 2048
        $region32: #{tpu_custom_call.1} parent=27 // pred_fallthru
          _
        // Predicated region
        $region33: #{tpu_custom_call.1} parent=27 // pred_check
          %p157 = pneg %p62
        $region34: #{tpu_custom_call.1} parent=27 // pred_check_branch
          %159 = sbr.rel (%p157) target = $region36
        $region35: #{tpu_custom_call.1} parent=27 // pred_region
          %160 = dma.done [#allocation6], 2048
        $region36: #{tpu_custom_call.1} parent=27 // pred_fallthru
          _
        %s161 = sand.u32 %s28, 1
        %s162 = scalar_lea.sflag [#allocation3], %s161
        %s163 = sand.u32 %s28, 1
        %s164 = smul.addr %s163, 128
        %s165 = scalar_lea.vmem [#allocation2], %s164
        %p166 = pneg %p41
        %p167 = pneg %p38
        %p168 = pneg %p62
        %p169 = pneg %p59
        %p170 = pneg %p88
        %p171 = pneg %p85
        %s172 = sand.u32 %s75, 1
        %s173 = scalar_lea.sflag [#allocation4], %s172
        %s174 = sand.u32 %s75, 1
        %s175 = smul.addr %s174, 64
        %s176 = scalar_lea.vmem [#allocation7], %s175
        %s177 = smul.u32 16, %s20
        %s178 = smul.u32 16, %s20
        %v179 = vld [vmem:[%s152] sm:$0xff]
        %v180 = vld [vmem:[%s152 + $0x8] sm:$0xff]
        %v181 = vld [vmem:[%s152 + $0x10] sm:$0xff]
        %v182 = vld [vmem:[%s152 + $0x18] sm:$0xff]
        %v183 = vld [vmem:[%s152 + $0x20] sm:$0xff]
        %v184 = vld [vmem:[%s152 + $0x28] sm:$0xff]
        %v185 = vld [vmem:[%s152 + $0x30] sm:$0xff]
        %v186 = vld [vmem:[%s152 + $0x38] sm:$0xff]
        %v187 = vld [vmem:[%s152 + $0x40] sm:$0xff]
        %v188 = vld [vmem:[%s152 + $0x48] sm:$0xff]
        %v189 = vld [vmem:[%s152 + $0x50] sm:$0xff]
        %v190 = vld [vmem:[%s152 + $0x58] sm:$0xff]
        %v191 = vld [vmem:[%s152 + $0x60] sm:$0xff]
        %v192 = vld [vmem:[%s152 + $0x68] sm:$0xff]
        %v193 = vld [vmem:[%s152 + $0x70] sm:$0xff]
        %v194 = vld [vmem:[%s152 + $0x78] sm:$0xff]
        %v195 = vld [vmem:[#allocation5] sm:$0xff]
        %v196 = vld [vmem:[#allocation5 + $0x8] sm:$0xff]
        %v197 = vld [vmem:[#allocation5 + $0x10] sm:$0xff]
        %v198 = vld [vmem:[#allocation5 + $0x18] sm:$0xff]
        %v199 = vld [vmem:[#allocation5 + $0x20] sm:$0xff]
        %v200 = vld [vmem:[#allocation5 + $0x28] sm:$0xff]
        %v201 = vld [vmem:[#allocation5 + $0x30] sm:$0xff]
        %v202 = vld [vmem:[#allocation5 + $0x38] sm:$0xff]
        %v203 = vld [vmem:[#allocation5 + $0x40] sm:$0xff]
        %v204 = vld [vmem:[#allocation5 + $0x48] sm:$0xff]
        %v205 = vld [vmem:[#allocation5 + $0x50] sm:$0xff]
        %v206 = vld [vmem:[#allocation5 + $0x58] sm:$0xff]
        %v207 = vld [vmem:[#allocation5 + $0x60] sm:$0xff]
        %v208 = vld [vmem:[#allocation5 + $0x68] sm:$0xff]
        %v209 = vld [vmem:[#allocation5 + $0x70] sm:$0xff]
        %v210 = vld [vmem:[#allocation5 + $0x78] sm:$0xff]
        %211 = vmatprep.subr.mxu0 0.0
        %212 = vmatpush1.msra.mxu0 %v195
        %213 = vmatprep.subr.mxu0 0.0
        %214 = vmatpush1.msra.mxu0 %v196
        %215 = vmatprep.subr.mxu0 0.0
        %216 = vmatpush1.msra.mxu0 %v197
        %217 = vmatprep.subr.mxu0 0.0
        %218 = vmatpush1.msra.mxu0 %v198
        %219 = vmatprep.subr.mxu0 0.0
        %220 = vmatpush1.msra.mxu0 %v199
        %221 = vmatprep.subr.mxu0 0.0
        %222 = vmatpush1.msra.mxu0 %v200
        %223 = vmatprep.subr.mxu0 0.0
        %224 = vmatpush1.msra.mxu0 %v201
        %225 = vmatprep.subr.mxu0 0.0
        %226 = vmatpush1.msra.mxu0 %v202
        %227 = vmatprep.subr.mxu0 0.0
        %228 = vmatpush1.msra.mxu0 %v203
        %229 = vmatprep.subr.mxu0 0.0
        %230 = vmatpush1.msra.mxu0 %v204
        %231 = vmatprep.subr.mxu0 0.0
        %232 = vmatpush1.msra.mxu0 %v205
        %233 = vmatprep.subr.mxu0 0.0
        %234 = vmatpush1.msra.mxu0 %v206
        %235 = vmatprep.subr.mxu0 0.0
        %236 = vmatpush1.msra.mxu0 %v207
        %237 = vmatprep.subr.mxu0 0.0
        %238 = vmatpush1.msra.mxu0 %v208
        %239 = vmatprep.subr.mxu0 0.0
        %240 = vmatpush1.msra.mxu0 %v209
        %241 = vmatprep.subr.mxu0 0.0
        %242 = vmatpush1.msra.mxu0 %v210
        %243 = vmatprep.subr.mxu0 0.0
        %244 = vmatpush1.msra.mxu0 0.0
        %245 = vmatprep.subr.mxu0 0.0
        %246 = vmatpush1.msra.mxu0 0.0
        %247 = vmatprep.subr.mxu0 0.0
        %248 = vmatpush1.msra.mxu0 0.0
        %249 = vmatprep.subr.mxu0 0.0
        %250 = vmatpush1.msra.mxu0 0.0
        %251 = vmatprep.subr.mxu0 0.0
        %252 = vmatpush1.msra.mxu0 0.0
        %253 = vmatprep.subr.mxu0 0.0
        %254 = vmatpush1.msra.mxu0 0.0
        %255 = vmatprep.subr.mxu0 0.0
        %256 = vmatpush1.msra.mxu0 0.0
        %257 = vmatprep.subr.mxu0 0.0
        %258 = vmatpush1.msra.mxu0 0.0
        %259 = vmatprep.subr.mxu0 0.0
        %260 = vmatpush1.msra.mxu0 0.0
        %261 = vmatprep.subr.mxu0 0.0
        %262 = vmatpush1.msra.mxu0 0.0
        %263 = vmatprep.subr.mxu0 0.0
        %264 = vmatpush1.msra.mxu0 0.0
        %265 = vmatprep.subr.mxu0 0.0
        %266 = vmatpush1.msra.mxu0 0.0
        %267 = vmatprep.subr.mxu0 0.0
        %268 = vmatpush1.msra.mxu0 0.0
        %269 = vmatprep.subr.mxu0 0.0
        %270 = vmatpush1.msra.mxu0 0.0
        %271 = vmatprep.subr.mxu0 0.0
        %272 = vmatpush1.msra.mxu0 0.0
        %273 = vmatprep.subr.mxu0 0.0
        %274 = vmatpush1.msra.mxu0 0.0
        %275 = vmatprep.mubr.f32.mxu0 0.0
        %276 = vmatmul.mubr.f32.gmra.mrb[0].mxu0 %v179
        %v277 = vpop.f32.mrb[0].mxu0
        %v278 = vadd.f32 0.0, %v277
        %v279 = vpop.f32.mrb[0].mxu0
        %280 = vmatprep.mubr.f32.mxu0 0.0
        %281 = vmatmul.mubr.f32.gmra.mrb[0].mxu0 %v180
        %v282 = vpop.f32.mrb[0].mxu0
        %v283 = vadd.f32 0.0, %v282
        %v284 = vpop.f32.mrb[0].mxu0
        %285 = vmatprep.mubr.f32.mxu0 0.0
        %286 = vmatmul.mubr.f32.gmra.mrb[0].mxu0 %v181
        %v287 = vpop.f32.mrb[0].mxu0
        %v288 = vadd.f32 0.0, %v287
        %v289 = vpop.f32.mrb[0].mxu0
        %290 = vmatprep.mubr.f32.mxu0 0.0
        %291 = vmatmul.mubr.f32.gmra.mrb[0].mxu0 %v182
        %v292 = vpop.f32.mrb[0].mxu0
        %v293 = vadd.f32 0.0, %v292
        %v294 = vpop.f32.mrb[0].mxu0
        %295 = vmatprep.mubr.f32.mxu0 0.0
        %296 = vmatmul.mubr.f32.gmra.mrb[0].mxu0 %v183
        %v297 = vpop.f32.mrb[0].mxu0
        %v298 = vadd.f32 0.0, %v297
        %v299 = vpop.f32.mrb[0].mxu0
        %300 = vmatprep.mubr.f32.mxu0 0.0
        %301 = vmatmul.mubr.f32.gmra.mrb[0].mxu0 %v184
        %v302 = vpop.f32.mrb[0].mxu0
        %v303 = vadd.f32 0.0, %v302
        %v304 = vpop.f32.mrb[0].mxu0
        %305 = vmatprep.mubr.f32.mxu0 0.0
        %306 = vmatmul.mubr.f32.gmra.mrb[0].mxu0 %v185
        %v307 = vpop.f32.mrb[0].mxu0
        %v308 = vadd.f32 0.0, %v307
        %v309 = vpop.f32.mrb[0].mxu0
        %310 = vmatprep.mubr.f32.mxu0 0.0
        %311 = vmatmul.mubr.f32.gmra.mrb[0].mxu0 %v186
        %v312 = vpop.f32.mrb[0].mxu0
        %v313 = vadd.f32 0.0, %v312
        %v314 = vpop.f32.mrb[0].mxu0
        %315 = vmatprep.mubr.f32.mxu0 0.0
        %316 = vmatmul.mubr.f32.gmra.mrb[0].mxu0 %v187
        %v317 = vpop.f32.mrb[0].mxu0
        %v318 = vadd.f32 0.0, %v317
        %v319 = vpop.f32.mrb[0].mxu0
        %320 = vmatprep.mubr.f32.mxu0 0.0
        %321 = vmatmul.mubr.f32.gmra.mrb[0].mxu0 %v188
        %v322 = vpop.f32.mrb[0].mxu0
        %v323 = vadd.f32 0.0, %v322
        %v324 = vpop.f32.mrb[0].mxu0
        %325 = vmatprep.mubr.f32.mxu0 0.0
        %326 = vmatmul.mubr.f32.gmra.mrb[0].mxu0 %v189
        %v327 = vpop.f32.mrb[0].mxu0
        %v328 = vadd.f32 0.0, %v327
        %v329 = vpop.f32.mrb[0].mxu0
        %330 = vmatprep.mubr.f32.mxu0 0.0
        %331 = vmatmul.mubr.f32.gmra.mrb[0].mxu0 %v190
        %v332 = vpop.f32.mrb[0].mxu0
        %v333 = vadd.f32 0.0, %v332
        %v334 = vpop.f32.mrb[0].mxu0
        %335 = vmatprep.mubr.f32.mxu0 0.0
        %336 = vmatmul.mubr.f32.gmra.mrb[0].mxu0 %v191
        %v337 = vpop.f32.mrb[0].mxu0
        %v338 = vadd.f32 0.0, %v337
        %v339 = vpop.f32.mrb[0].mxu0
        %340 = vmatprep.mubr.f32.mxu0 0.0
        %341 = vmatmul.mubr.f32.gmra.mrb[0].mxu0 %v192
        %v342 = vpop.f32.mrb[0].mxu0
        %v343 = vadd.f32 0.0, %v342
        %v344 = vpop.f32.mrb[0].mxu0
        %345 = vmatprep.mubr.f32.mxu0 0.0
        %346 = vmatmul.mubr.f32.gmra.mrb[0].mxu0 %v193
        %v347 = vpop.f32.mrb[0].mxu0
        %v348 = vadd.f32 0.0, %v347
        %v349 = vpop.f32.mrb[0].mxu0
        %350 = vmatprep.mubr.f32.mxu0 0.0
        %351 = vmatmul.mubr.f32.gmra.mrb[0].mxu0 %v194
        %v352 = vpop.f32.mrb[0].mxu0
        %v353 = vadd.f32 0.0, %v352
        %v354 = vpop.f32.mrb[0].mxu0
        %355 = vdwg.mxu0
        %v356 = vpack.c.bf16 %v283, %v278
        %v357 = vpack.c.bf16 %v293, %v288
        %v358 = vpack.c.bf16 %v303, %v298
        %v359 = vpack.c.bf16 %v313, %v308
        %v360 = vpack.c.bf16 %v323, %v318
        %v361 = vpack.c.bf16 %v333, %v328
        %v362 = vpack.c.bf16 %v343, %v338
        %v363 = vpack.c.bf16 %v353, %v348
        %v372 = vunpack.c.l.b16 %v356
        %v373 = vunpack.c.h.b16 %v356
        %v374 = vunpack.c.l.b16 %v357
        %v375 = vunpack.c.h.b16 %v357
        %v376 = vunpack.c.l.b16 %v358
        %v377 = vunpack.c.h.b16 %v358
        %v378 = vunpack.c.l.b16 %v359
        %v379 = vunpack.c.h.b16 %v359
        %v380 = vunpack.c.l.b16 %v360
        %v381 = vunpack.c.h.b16 %v360
        %v382 = vunpack.c.l.b16 %v361
        %v383 = vunpack.c.h.b16 %v361
        %v384 = vunpack.c.l.b16 %v362
        %v385 = vunpack.c.h.b16 %v362
        %v386 = vunpack.c.l.b16 %v363
        %v387 = vunpack.c.h.b16 %v363
        %v388 = vpack.c.b16 %v372, %v372
        %v389 = vpack.c.b16 %v373, %v373
        %v390 = vpack.c.b16 %v374, %v374
        %v391 = vpack.c.b16 %v375, %v375
        %v392 = vpack.c.b16 %v376, %v376
        %v393 = vpack.c.b16 %v377, %v377
        %v394 = vpack.c.b16 %v378, %v378
        %v395 = vpack.c.b16 %v379, %v379
        %v396 = vpack.c.b16 %v380, %v380
        %v397 = vpack.c.b16 %v381, %v381
        %v398 = vpack.c.b16 %v382, %v382
        %v399 = vpack.c.b16 %v383, %v383
        %v400 = vpack.c.b16 %v384, %v384
        %v401 = vpack.c.b16 %v385, %v385
        %v402 = vpack.c.b16 %v386, %v386
        %v403 = vpack.c.b16 %v387, %v387
        %420 = vst [vmem:[%s176] sm:$0xf] %v388
        %421 = vst [vmem:[%s176 + $0x4] sm:$0xf] %v389
        %422 = vst [vmem:[%s176 + $0x8] sm:$0xf] %v390
        %423 = vst [vmem:[%s176 + $0xc] sm:$0xf] %v391
        %424 = vst [vmem:[%s176 + $0x10] sm:$0xf] %v392
        %425 = vst [vmem:[%s176 + $0x14] sm:$0xf] %v393
        %426 = vst [vmem:[%s176 + $0x18] sm:$0xf] %v394
        %427 = vst [vmem:[%s176 + $0x1c] sm:$0xf] %v395
        %428 = vst [vmem:[%s176 + $0x20] sm:$0xf] %v396
        %429 = vst [vmem:[%s176 + $0x24] sm:$0xf] %v397
        %430 = vst [vmem:[%s176 + $0x28] sm:$0xf] %v398
        %431 = vst [vmem:[%s176 + $0x2c] sm:$0xf] %v399
        %432 = vst [vmem:[%s176 + $0x30] sm:$0xf] %v400
        %433 = vst [vmem:[%s176 + $0x34] sm:$0xf] %v401
        %434 = vst [vmem:[%s176 + $0x38] sm:$0xf] %v402
        %435 = vst [vmem:[%s176 + $0x3c] sm:$0xf] %v403
        %s436 = sand.u32 %s75, 1
        %s437 = scalar_lea.sflag [#allocation4], %s436
        %s438 = sand.u32 %s75, 1
        %s439 = smul.addr %s438, 64
        %s440 = scalar_lea.vmem [#allocation7], %s439
        // Predicated region
        $region37: #{tpu_custom_call.1} parent=27 // pred_check
          %p441 = pneg %p85
        $region38: #{tpu_custom_call.1} parent=27 // pred_check_branch
          %443 = sbr.rel (%p441) target = $region40
        $region39: #{tpu_custom_call.1} parent=27 // pred_region
          %s444 = smul.u32 16, %s20
          %s446 = ssub.s32 1024, 1024
          %447 = vsyncadd %s437, %s446
          %s448 = smul.addr %s444, 64
          %s449 = scalar_lea.hbm %s2, %s448
          %s450 = sshll.u32 %s440, 4
          %s451 = int_to_ptr.vmem [resolvable:$true] %s450
          %456 = dma.vmem_to_hbm [thread:$0]  %s451, 1024, %s449, %s437, 64, 64, 4
        $region40: #{tpu_custom_call.1} parent=27 // pred_fallthru
          _
      $region28: #{tpu_custom_call.1} parent=5 // pred_fallthru
        _
      %p457 = scmp.le.s32.totalorder 2, %s15
      // Predicated region
      $region41: #{tpu_custom_call.1} parent=5 // pred_check
        %p458 = pneg %p457
      $region42: #{tpu_custom_call.1} parent=5 // pred_check_branch
        %460 = sbr.rel (%p458) target = $region44
      $region43: #{tpu_custom_call.1} parent=5 // pred_region
        %s461 = ssub.s32 %s15, 2
        // Predicated region
        $region45: #{tpu_custom_call.1} parent=43 // pred_check
          %p462 = pneg %p91
        $region46: #{tpu_custom_call.1} parent=43 // pred_check_branch
          %464 = sbr.rel (%p462) target = $region48
        $region47: #{tpu_custom_call.1} parent=43 // pred_region
          %s465 = sand.u32 %s76, 1
          %s466 = scalar_lea.sflag [#allocation4], %s465
          %s467 = sand.u32 %s76, 1
          %s468 = smul.addr %s467, 64
          %s469 = scalar_lea.vmem [#allocation7], %s468
          %470 = dma.done %s466, 1024
        $region48: #{tpu_custom_call.1} parent=43 // pred_fallthru
          _
      $region44: #{tpu_custom_call.1} parent=5 // pred_fallthru
        _
    $region6: #{tpu_custom_call.1} parent=1 // loop_footer
      %s19 = sadd.s32 1, %s15
    $region7: #{tpu_custom_call.1} parent=1 // loop_footer_branch
      %14 = sbr.rel target = $region3
    $region8: #{tpu_custom_call.1} parent=1 // loop_exit
      _
    %471 = vsyncpa [#allocation3], 1
    %s472 = scalar_lea.sflag [#allocation3], 1
    %473 = vsyncpa %s472, 1
    %474 = vsyncpa [#allocation6], 1
    %475 = vsyncpa [#allocation4], 1
    %s476 = scalar_lea.sflag [#allocation4], 1
    %477 = vsyncpa %s476, 1

</llo_original>
